<compile_context>
chip_gen: v6e
topology: v6e:2x2x1
jax: 0.10.0
libtpu: 0.0.40
codegen_flags: <defaults>
</compile_context>

<pallas_src>
import math
import functools

import jax
import jax.numpy as jnp
from jax.experimental import pallas as pl
from jax.experimental.pallas import tpu as pltpu

SCALE = 30.0
MARGIN = 0.5
COS_M = math.cos(MARGIN)
SIN_M = math.sin(MARGIN)
TH = math.cos(math.pi - MARGIN)
MM = math.sin(math.pi - MARGIN) * MARGIN


def _sublane_multiple(dtype):
    return {4: 8, 2: 16, 1: 32}.get(jnp.dtype(dtype).itemsize, 8)


def _pick_tile(dim, tile_max, align):
    # Full dim is always a legal block shape ("equal to the full array dim"),
    # no (8,128) constraint and no masked edge.  Only dims larger than the
    # budget get an aligned tile + cdiv grid with a masked partial edge block.
    if dim <= tile_max:
        return dim
    return max(align, (tile_max // align) * align)


def arcface_kernel(cosine_ref, label_ref, out_ref, *,
                   scale, cos_m, sin_m, th, mm, tc, easy_margin):
    x = cosine_ref[...]                       # native dtype (f32 / bf16)
    xf = x.astype(jnp.float32)

    # Margin math in f32 (sqrt on the EUP).  The clamp avoids NaN for
    # |cosine| >= 1 and keeps masked-edge garbage reads finite.
    sine = jnp.sqrt(jnp.maximum(1.0 - xf * xf, 0.0))
    phi_f = xf * cos_m - sine * sin_m

    if easy_margin:
        cond = xf > 0.0
        alt = x
    else:
        cond = xf > th
        alt = x - mm                          # native dtype (bf16 VALU on v6e/v7x)
    phi = jnp.where(cond, phi_f.astype(x.dtype), alt)

    # One-hot as a select.  Shift the (TB,1) label by the class-tile origin
    # (per-row subtract) instead of offsetting the full-tile iota (saves a
    # full-tile VALU add; relevant on v7x).
    label_local = label_ref[...] - pl.program_id(1) * tc   # (TB, 1) int32
    col_ids = jax.lax.broadcasted_iota(jnp.int32, x.shape, 1)
    out = jnp.where(col_ids == label_local, phi, x) * scale

    out_ref[...] = out.astype(out_ref.dtype)


def arcface_loss(cosine, label, *,
                 scale=SCALE, easy_margin=False,
                 tb_max=512, tc_max=4096, donate_cosine=False):
    """cosine: (B, C) float, label: (B,) int -> (B, C) logits (same dtype as cosine)."""
    B, C = cosine.shape
    out_dtype = cosine.dtype
    itemsize = jnp.dtype(out_dtype).itemsize

    TB = _pick_tile(B, tb_max, _sublane_multiple(out_dtype))
    TC = _pick_tile(C, tc_max, 128)
    grid = (pl.cdiv(B, TB), pl.cdiv(C, TC))

    label2d = label.astype(jnp.int32).reshape(B, 1)

    kernel = functools.partial(
        arcface_kernel,
        scale=float(scale), cos_m=COS_M, sin_m=SIN_M, th=TH, mm=MM,
        tc=TC, easy_margin=easy_margin,
    )

    # Live VMEM ~= double-buffered (in tile + out tile + lane-padded label).
    tile_bytes = TB * TC * itemsize
    label_bytes = TB * 128 * 4
    live_bytes = 2 * (2 * tile_bytes + label_bytes)
    vmem_limit = min(127 * 1024 * 1024,
                     max(32 * 1024 * 1024, int(live_bytes * 1.2) + (2 << 20)))

    cost = pl.CostEstimate(
        flops=10 * B * C,
        transcendentals=B * C,
        bytes_accessed=2 * B * C * itemsize + B * 4,
    )

    return pl.pallas_call(
        kernel,
        out_shape=jax.ShapeDtypeStruct((B, C), out_dtype),
        grid_spec=pltpu.PrefetchScalarGridSpec(
            num_scalar_prefetch=0,
            grid=grid,
            in_specs=[
                pl.BlockSpec((TB, TC), lambda i, j: (i, j)),   # cosine tile
                pl.BlockSpec((TB, 1), lambda i, j: (i, 0)),    # label (reused over j)
            ],
            out_specs=pl.BlockSpec((TB, TC), lambda i, j: (i, j)),
        ),
        compiler_params=pltpu.CompilerParams(
            dimension_semantics=("parallel", "parallel"),
            vmem_limit_bytes=vmem_limit,
        ),
        cost_estimate=cost,
        input_output_aliases=({0: 0} if donate_cosine else {}),
    )(cosine, label2d)


def arcface_ref(cosine, label, *, scale=SCALE, easy_margin=False):
    """Pure-JAX reference mirroring the PyTorch forward (f32 math)."""
    x = cosine.astype(jnp.float32)
    sine = jnp.sqrt(jnp.maximum(1.0 - x * x, 0.0))
    phi = x * COS_M - sine * SIN_M
    if easy_margin:
        phi = jnp.where(x > 0.0, phi, x)
    else:
        phi = jnp.where(x > TH, phi, x - MM)
    one_hot = jax.nn.one_hot(label, x.shape[1], dtype=jnp.float32)
    return (one_hot * phi + (1.0 - one_hot) * x) * scale


def _check(cosine, label, name, atol, **kw):
    out = jax.block_until_ready(arcface_loss(cosine, label, **kw))
    ref = arcface_ref(cosine, label,
                      easy_margin=kw.get("easy_margin", False))
    assert out.shape == cosine.shape, f"{name}: bad shape"
    assert out.dtype == cosine.dtype, f"{name}: bad dtype"
    assert jnp.allclose(out.astype(jnp.float32), ref, atol=atol), f"{name}: mismatch"


if __name__ == "__main__":
    key = jax.random.PRNGKey(0)
    k1, k2, k3, k4, k5, k6 = jax.random.split(key, 6)

    # Case 1: small, perfectly aligned (B=8, C=128) -> single block.
    B, C = 8, 128
    cos1 = jax.random.uniform(k1, (B, C), jnp.float32, minval=-0.999, maxval=0.999)
    lab1 = jax.random.randint(k2, (B,), 0, C, dtype=jnp.int32)
    _check(cos1, lab1, "aligned_f32", 1e-5)

    # Case 2: non-aligned shapes -> full-dim block (12, 200), grid (1, 1).
    B2, C2 = 12, 200
    cos2 = jax.random.uniform(k3, (B2, C2), jnp.float32, minval=-0.999, maxval=0.999)
    lab2 = jax.random.randint(k4, (B2,), 0, C2, dtype=jnp.int32)
    _check(cos2, lab2, "fulldim_f32", 1e-5)

    # Case 3: force class tiling with a masked partial edge block (TC=128, grid_c=2).
    _check(cos2, lab2, "classtiled_f32", 1e-5, tc_max=128)

    # Case 4: force row + class tiling with masked edges in both axes.
    _check(cos2, lab2, "rowtiled_f32", 1e-5, tb_max=8, tc_max=128)

    # Case 5: bf16 I/O with class tiling (exercises the native-dtype tail path).
    B3, C3 = 24, 333
    cos3 = jax.random.uniform(k5, (B3, C3), jnp.float32,
                              minval=-0.999, maxval=0.999).astype(jnp.bfloat16)
    lab3 = jax.random.randint(k6, (B3,), 0, C3, dtype=jnp.int32)
    _check(cos3, lab3, "classtiled_bf16", 0.5, tc_max=256)

    # Case 6: easy_margin=True path.
    _check(cos2, lab2, "easy_margin_f32", 1e-5, easy_margin=True)

    print("KERNEL_OK")
</pallas_src>

<mosaic_0001>
module attributes {stable_mosaic.version = 11 : i64} {
  func.func @arcface_kernel(%arg0: i32, %arg1: i32, %arg2: memref<8x128xf32, #tpu.memory_space<vmem>>, %arg3: memref<8x1xi32, #tpu.memory_space<vmem>>, %arg4: memref<8x128xf32, #tpu.memory_space<vmem>>) attributes {dimension_semantics = [#tpu.dimension_semantics<parallel>, #tpu.dimension_semantics<parallel>], iteration_bounds = array<i64: 1, 1>, scalar_prefetch = 0 : i64, scratch_operands = 0 : i64, tpu.core_type = #tpu.core_type<tc>, window_params = [{transform_indices = @transform_0, window_bounds = array<i64: 8, 128>}, {transform_indices = @transform_1, window_bounds = array<i64: 8, 1>}, {transform_indices = @transform_2, window_bounds = array<i64: 8, 128>}]} {
    %c0 = arith.constant 0 : index
    %c0_0 = arith.constant 0 : index
    %0 = vector.load %arg2[%c0, %c0_0] : memref<8x128xf32, #tpu.memory_space<vmem>>, vector<8x128xf32>
    %1 = arith.mulf %0, %0 : vector<8x128xf32>
    %cst = arith.constant 1.000000e+00 : f32
    %2 = vector.broadcast %cst : f32 to vector<8x128xf32>
    %3 = arith.subf %2, %1 : vector<8x128xf32>
    %cst_1 = arith.constant 0.000000e+00 : f32
    %4 = vector.broadcast %cst_1 : f32 to vector<8x128xf32>
    %5 = arith.maximumf %3, %4 : vector<8x128xf32>
    %6 = math.sqrt %5 : vector<8x128xf32>
    %cst_2 = arith.constant 0.87758255 : f32
    %7 = vector.broadcast %cst_2 : f32 to vector<8x128xf32>
    %8 = arith.mulf %0, %7 : vector<8x128xf32>
    %cst_3 = arith.constant 0.47942555 : f32
    %9 = vector.broadcast %cst_3 : f32 to vector<8x128xf32>
    %10 = arith.mulf %6, %9 : vector<8x128xf32>
    %11 = arith.subf %8, %10 : vector<8x128xf32>
    %cst_4 = arith.constant -0.87758255 : f32
    %12 = vector.broadcast %cst_4 : f32 to vector<8x128xf32>
    %13 = arith.cmpf ogt, %0, %12 : vector<8x128xf32>
    %cst_5 = arith.constant 0.239712775 : f32
    %14 = vector.broadcast %cst_5 : f32 to vector<8x128xf32>
    %15 = arith.subf %0, %14 : vector<8x128xf32>
    %16 = arith.select %13, %11, %15 : vector<8x128xi1>, vector<8x128xf32>
    %c0_6 = arith.constant 0 : index
    %c0_7 = arith.constant 0 : index
    %17 = vector.load %arg3[%c0_6, %c0_7] : memref<8x1xi32, #tpu.memory_space<vmem>>, vector<8x1xi32>
    %c128_i32 = arith.constant 128 : i32
    %18 = arith.muli %arg1, %c128_i32 : i32
    %19 = vector.broadcast %18 : i32 to vector<8x1xi32>
    %20 = arith.subi %17, %19 : vector<8x1xi32>
    %21 = tpu.iota {dimensions = array<i32: 1>} : vector<8x128xi32>
    %22 = vector.broadcast %20 : vector<8x1xi32> to vector<8x128xi32>
    %23 = arith.cmpi eq, %21, %22 : vector<8x128xi32>
    %24 = arith.select %23, %16, %0 : vector<8x128xi1>, vector<8x128xf32>
    %cst_8 = arith.constant 3.000000e+01 : f32
    %25 = vector.broadcast %cst_8 : f32 to vector<8x128xf32>
    %26 = arith.mulf %24, %25 : vector<8x128xf32>
    %c0_9 = arith.constant 0 : index
    %c0_10 = arith.constant 0 : index
    %27 = vector.load %arg4[%c0_9, %c0_10] : memref<8x128xf32, #tpu.memory_space<vmem>>, vector<8x128xf32>
    tpu.vector_store %arg4[%c0_9, %c0_10], %26 {strides = array<i32>} : memref<8x128xf32, #tpu.memory_space<vmem>>, vector<8x128xf32>,
    return
  }
  func.func @transform_0(%arg0: i32, %arg1: i32) -> (i32, i32) {
    %c0_i32 = arith.constant 0 : i32
    return %arg0, %arg1 : i32, i32
  }
  func.func @transform_1(%arg0: i32, %arg1: i32) -> (i32, i32) {
    %c0_i32 = arith.constant 0 : i32
    %c0_i32_0 = arith.constant 0 : i32
    return %arg0, %c0_i32 : i32, i32
  }
  func.func @transform_2(%arg0: i32, %arg1: i32) -> (i32, i32) {
    %c0_i32 = arith.constant 0 : i32
    return %arg0, %arg1 : i32, i32
  }
}

</mosaic_0001>

<llo_original>
// kernel: tpu_custom_call.1
$region0: #{tpu_custom_call.1}
  #allocation0 [shape = 'u32[]', space=smem, size = 0x4, offset = 0x4, fixed_abs, tag = 'smem constant byte address 0x4 - core index']
  #allocation1 [shape = 'u32[144,128]{1,0:T(1,128)}', space=vmem, size = 0x12000, scoped, tag = 'internal scratch']
  %s0 = inlined_call_operand.vmem [shape: f32[8,128], index: 0, kind: input, shape index: {}]
  %s1 = inlined_call_operand.vmem [shape: s32[8,1], index: 1, kind: input, shape index: {}]
  %s2 = inlined_call_operand.hbm [shape: f32[8,128], index: 2, kind: output, shape index: {}]
  %s3 = sld [smem:[#allocation0]]
  $region18: #{tpu_custom_call.1} parent=0
    _
  %s5 = ssub.s32 1, %s3
  %s6 = scalar_select 0, %s5, %s3
  $region1: #{tpu_custom_call.1} parent=0
    #allocation2 [shape = 'u8[4096]{0}', space=vmem, size = 0x1000, scoped, tag = 'output window, operand 0, single buffered']
    #allocation3 [shape = 's32[1]{0}', space=sflag, size = 0x4, scoped, tag = 'scoped memory for tpu_custom_call.1']
    %7 = vsyncpa [#allocation3], 0
    // Predicated region
    $region2: #{tpu_custom_call.1} parent=1 // pred_check
      _
    $region3: #{tpu_custom_call.1} parent=1 // pred_check_branch
      %9 = sbr.rel (0) target = $region5
    $region4: #{tpu_custom_call.1} parent=1 // pred_region
      _
    $region5: #{tpu_custom_call.1} parent=1 // pred_fallthru
      _
    // Predicated region
    $region6: #{tpu_custom_call.1} parent=1 // pred_check
      _
    $region7: #{tpu_custom_call.1} parent=1 // pred_check_branch
      %11 = sbr.rel (0) target = $region9
    $region8: #{tpu_custom_call.1} parent=1 // pred_region
      _
    $region9: #{tpu_custom_call.1} parent=1 // pred_fallthru
      _
    %v12 = vld [vmem:[%s0] sm:$0xff]
    %v13 = vmul.f32 %v12, %v12
    %v14 = vsub.f32 1.0, %v13
    %v15 = vmax.f32 %v14, 0.0
    %v16 = vrsqrt.pop %v15
    %v17 = vmul.f32 %v15, %v16
    %vm18 = vcmp.eq.f32.partialorder %v15, inf
    %v19 = vsel %vm18, %v15, %v17
    %vm20 = vcmp.eq.f32.partialorder %v15, 0.0
    %v21 = vand.u32 %v15, 2147483648
    %v22 = vsel %vm20, %v21, %v19
    %v23 = vmul.f32 %v12, 0.87758255
    %v24 = vmul.f32 %v22, 0.47942555
    %v25 = vsub.f32 %v23, %v24
    %vm26 = vcmp.gt.f32.partialorder %v12, -0.87758255
    %v27 = vsub.f32 %v12, 0.23971277
    %v28 = vsel %vm26, %v25, %v27
    %v29 = vld [vmem:[%s1] sm:$0xff]
    %s30 = smul.u32 0, 128
    %v31 = vstv %s30
    %v32 = vsub.s32 %v29, %v31
    %v33 = vlaneseq
    %v34 = vand.u32 %v33, 127
    %35 = vset.pattern.permute.xlu0 0
    %36 = vperm.xlu0 %35, %v32
    %v37 = vpop.permute.xlu0 %36
    %vm38 = vcmp.eq.s32.totalorder %v34, %v37
    %v39 = vsel %vm38, %v28, %v12
    %v40 = vmul.f32 %v39, 30.0
    %41 = vst [vmem:[#allocation2] sm:$0xff] %v40
    // Predicated region
    $region10: #{tpu_custom_call.1} parent=1 // pred_check
      _
    $region11: #{tpu_custom_call.1} parent=1 // pred_check_branch
      %43 = sbr.rel (0) target = $region13
    $region12: #{tpu_custom_call.1} parent=1 // pred_region
      %s45 = ssub.s32 128, 128
      %46 = vsyncadd [#allocation3], %s45
      %s48 = sshll.u32 [#allocation2], 4
      %s49 = int_to_ptr.vmem [resolvable:$true] %s48
      %51 = dma.vmem_to_hbm [thread:$0]  %s49, 128, %s2, [#allocation3]
    $region13: #{tpu_custom_call.1} parent=1 // pred_fallthru
      _
    // Predicated region
    $region14: #{tpu_custom_call.1} parent=1 // pred_check
      _
    $region15: #{tpu_custom_call.1} parent=1 // pred_check_branch
      %53 = sbr.rel (0) target = $region17
    $region16: #{tpu_custom_call.1} parent=1 // pred_region
      %54 = dma.done [#allocation3], 128
    $region17: #{tpu_custom_call.1} parent=1 // pred_fallthru
      _
    %55 = vsyncpa [#allocation3], 1

</llo_original>
